<compile_context>
chip_gen: v7x
topology: tpu7x:2x2x1
jax: 0.10.0
libtpu: 0.0.40
codegen_flags: <defaults>
</compile_context>

<pallas_src>
import functools

import jax
import jax.numpy as jnp
from jax.experimental import pallas as pl
from jax.experimental.pallas import tpu as pltpu


def _round_up(v, m):
    return ((v + m - 1) // m) * m


def _cdiv(a, b):
    return (a + b - 1) // b


def deeponet_kernel(x_ref,
                    wb1_ref, bb1_ref, wb2_ref, bb2_ref,
                    wt1_ref, bt1_ref, wt2_ref, bt2_ref,
                    sel_ref, out_ref, *, n_features):
    cd = x_ref.dtype                        # streaming/compute dtype (f32 or bf16)
    x = x_ref[...]                          # (tb, n_features + 1)
    y = x[:, :n_features]                   # static lane select
    dt = x[:, n_features:n_features + 1]    # (tb, 1)

    # Branch MLP (MXU): Linear -> tanh -> Linear -> tanh.
    # Matmuls accumulate in f32; tanh runs in f32 (v5e has no bf16 VPU/EUP).
    hb = jnp.tanh(jnp.dot(y, wb1_ref[...],
                          preferred_element_type=jnp.float32) + bb1_ref[...])
    b = jnp.tanh(jnp.dot(hb.astype(cd), wb2_ref[...],
                         preferred_element_type=jnp.float32) + bb2_ref[...])

    # Trunk MLP: first layer is a (tb,1)x(1,H) rank-1 contraction -> VPU
    # broadcast multiply in f32 (no wasted K=1 MXU pass).
    ht = jnp.tanh(dt.astype(jnp.float32) * wt1_ref[...] + bt1_ref[...])
    t = jnp.tanh(jnp.dot(ht.astype(cd), wt2_ref[...],
                         preferred_element_type=jnp.float32) + bt2_ref[...])

    # Transposed grouped sum: sel (n_out_pad, out_dim) contracted with
    # b*t (tb, out_dim) over out_dim -> (n_out_pad, tb).  Lanes carry the
    # batch, so stores are unmasked whenever tb % 128 == 0 and the output
    # writeback is ~n_out rows instead of a 128-column padded slab.
    out_ref[...] = jax.lax.dot_general(
        sel_ref[...], b * t,
        dimension_numbers=(((1,), (1,)), ((), ())),
        preferred_element_type=jnp.float32).astype(out_ref.dtype)


@functools.lru_cache(maxsize=None)
def _selection_matrix(n_out, n_neuron, n_out_pad):
    """0/1 matrix: row o sums columns [o*n_neuron, (o+1)*n_neuron). Built once
    per (n_out, n_neuron) via iota compare (no scatter on the dispatch path)."""
    out_dim = n_out * n_neuron
    row = jax.lax.broadcasted_iota(jnp.int32, (n_out_pad, out_dim), 0)
    grp = jax.lax.broadcasted_iota(jnp.int32, (n_out_pad, out_dim), 1) // n_neuron
    return (row == grp).astype(jnp.float32)


def _tile_batch(batch, block_batch, min_tiles):
    """Balanced batch tiles: never pad by ~a whole tile for awkward batches."""
    n_tiles = max(_cdiv(batch, block_batch), min_tiles, 1)
    n_tiles = min(n_tiles, max(1, _cdiv(batch, 8)))
    tb = _cdiv(batch, n_tiles)
    # Multi-tile: tb must be a multiple of 128 (lane-dense output stores and
    # valid BlockSpec); single tile: only the 8-sublane multiple is needed.
    tb = _round_up(tb, 128) if n_tiles > 1 else _round_up(tb, 8)
    n_tiles = _cdiv(batch, tb)
    return tb, n_tiles * tb


def _build_call(*, tb, batch_pad, n_features, n_out_pad, out_dim, hidden,
                single_buffer_weights, vmem_limit_bytes):
    def const_spec(shape):
        # Constant-index operands are fetched once; single-buffer them so the
        # resident weights don't double their VMEM footprint.
        if single_buffer_weights:
            return pl.BlockSpec(shape, lambda i: (0, 0),
                                pipeline_mode=pl.Buffered(1))
        return pl.BlockSpec(shape, lambda i: (0, 0))

    kernel = functools.partial(deeponet_kernel, n_features=n_features)
    return pl.pallas_call(
        kernel,
        out_shape=jax.ShapeDtypeStruct((n_out_pad, batch_pad), jnp.float32),
        grid=(batch_pad // tb,),
        in_specs=[
            pl.BlockSpec((tb, n_features + 1), lambda i: (i, 0)),  # x tile
            const_spec((n_features, hidden)),   # wb1
            const_spec((1, hidden)),            # bb1
            const_spec((hidden, out_dim)),      # wb2
            const_spec((1, out_dim)),           # bb2
            const_spec((1, hidden)),            # wt1
            const_spec((1, hidden)),            # bt1
            const_spec((hidden, out_dim)),      # wt2
            const_spec((1, out_dim)),           # bt2
            const_spec((n_out_pad, out_dim)),   # sel
        ],
        out_specs=pl.BlockSpec((n_out_pad, tb), lambda i: (0, i)),
        compiler_params=pltpu.CompilerParams(
            # "parallel" lets v7x shard batch tiles across its 2 TensorCores.
            # TODO(synk): evaluate pltpu.CORE_PARALLEL on v7x for >=2-tile grids.
            dimension_semantics=("parallel",),
            vmem_limit_bytes=vmem_limit_bytes,  # < v7x's 64 MiB/TC; plenty on v5e/v6e
        ),
    )


def deeponet_forward(x, params, *, n_features, n_out, n_neuron,
                     block_batch=1024, min_tiles=1,
                     stream_dtype=jnp.bfloat16,
                     vmem_limit_bytes=48 * 1024 * 1024):
    (wb1, bb1, wb2, bb2, wt1, bt1, wt2, bt2) = params
    batch = x.shape[0]
    hidden = wb1.shape[1]
    out_dim = n_out * n_neuron
    n_out_pad = _round_up(n_out, 8)

    tb, batch_pad = _tile_batch(batch, block_batch, min_tiles)

    # Stream activations (and MXU-facing weights) in stream_dtype; biases and
    # the rank-1 trunk weight stay f32 since they combine with f32 accumulators.
    x_s = x.astype(stream_dtype)
    if batch_pad != batch:
        x_s = jnp.pad(x_s, ((0, batch_pad - batch), (0, 0)))
    wb1s = wb1.astype(stream_dtype)
    wb2s = wb2.astype(stream_dtype)
    wt2s = wt2.astype(stream_dtype)
    bb1f = bb1.astype(jnp.float32)
    bb2f = bb2.astype(jnp.float32)
    wt1f = wt1.astype(jnp.float32)
    bt1f = bt1.astype(jnp.float32)
    bt2f = bt2.astype(jnp.float32)

    sel = _selection_matrix(n_out, n_neuron, n_out_pad)

    operands = (x_s, wb1s, bb1f, wb2s, bb2f, wt1f, bt1f, wt2s, bt2f, sel)
    common = dict(tb=tb, batch_pad=batch_pad, n_features=n_features,
                  n_out_pad=n_out_pad, out_dim=out_dim, hidden=hidden,
                  vmem_limit_bytes=vmem_limit_bytes)
    try:
        out_pad = _build_call(single_buffer_weights=hasattr(pl, "Buffered"),
                              **common)(*operands)
    except Exception:
        # Fallback if pl.Buffered(1) is rejected by this jax build: default
        # double-buffered constant blocks (only costs extra VMEM).
        out_pad = _build_call(single_buffer_weights=False, **common)(*operands)

    # (n_out_pad, batch_pad) -> (batch, n_out)
    return out_pad[:n_out, :batch].T


def make_params(key, n_features, hidden, n_out, n_neuron):
    """Deterministic synthetic parameters, stored as (in, out) matrices."""
    out_dim = n_out * n_neuron
    ks = jax.random.split(key, 8)
    wb1 = jax.random.normal(ks[0], (n_features, hidden), jnp.float32) * 0.1
    bb1 = jax.random.normal(ks[1], (1, hidden), jnp.float32) * 0.1
    wb2 = jax.random.normal(ks[2], (hidden, out_dim), jnp.float32) * 0.1
    bb2 = jax.random.normal(ks[3], (1, out_dim), jnp.float32) * 0.1
    wt1 = jax.random.normal(ks[4], (1, hidden), jnp.float32) * 0.1
    bt1 = jax.random.normal(ks[5], (1, hidden), jnp.float32) * 0.1
    wt2 = jax.random.normal(ks[6], (hidden, out_dim), jnp.float32) * 0.1
    bt2 = jax.random.normal(ks[7], (1, out_dim), jnp.float32) * 0.1
    return (wb1, bb1, wb2, bb2, wt1, bt1, wt2, bt2)


def deeponet_ref(x, params, *, n_features, n_out, n_neuron):
    """Pure-JAX (f32) reference of the DeepONet forward."""
    (wb1, bb1, wb2, bb2, wt1, bt1, wt2, bt2) = params
    y = x[:, :n_features]
    dt = x[:, n_features:n_features + 1]
    b = jnp.tanh(jnp.tanh(y @ wb1 + bb1) @ wb2 + bb2)
    t = jnp.tanh(jnp.tanh(dt @ wt1 + bt1) @ wt2 + bt2)
    batch = x.shape[0]
    return jnp.sum((b * t).reshape(batch, n_out, n_neuron), axis=2)


if __name__ == "__main__":
    key = jax.random.PRNGKey(0)
    k_x, k_p, k_x2 = jax.random.split(key, 3)

    # Toy config: n_features state variables + trailing dt column.
    batch, n_features, hidden, n_out, n_neuron = 8, 8, 32, 4, 8
    x = jax.random.normal(k_x, (batch, n_features + 1), jnp.float32)
    params = make_params(k_p, n_features, hidden, n_out, n_neuron)
    ref = deeponet_ref(x, params, n_features=n_features, n_out=n_out,
                       n_neuron=n_neuron)

    # f32 streaming: tight match against the pure-JAX reference.
    out = jax.block_until_ready(deeponet_forward(
        x, params, n_features=n_features, n_out=n_out, n_neuron=n_neuron,
        stream_dtype=jnp.float32))
    assert out.shape == (batch, n_out)
    assert jnp.max(jnp.abs(out - ref)) < 1e-4

    # bf16 streaming (default, HBM-traffic optimized): looser tolerance.
    out_bf16 = jax.block_until_ready(deeponet_forward(
        x, params, n_features=n_features, n_out=n_out, n_neuron=n_neuron))
    assert out_bf16.shape == (batch, n_out)
    assert jnp.max(jnp.abs(out_bf16 - ref)) < 5e-2

    # Multi-tile grid: exercises balanced tiling, lane-dense (8,128) output
    # blocks and "parallel" batch sharding.
    batch2 = 300
    x2 = jax.random.normal(k_x2, (batch2, n_features + 1), jnp.float32)
    ref2 = deeponet_ref(x2, params, n_features=n_features, n_out=n_out,
                        n_neuron=n_neuron)
    out2 = jax.block_until_ready(deeponet_forward(
        x2, params, n_features=n_features, n_out=n_out, n_neuron=n_neuron,
        block_batch=128, min_tiles=2, stream_dtype=jnp.float32))
    assert out2.shape == (batch2, n_out)
    assert jnp.max(jnp.abs(out2 - ref2)) < 1e-4

    print("KERNEL_OK")
</pallas_src>

<mosaic_0001>
module attributes {stable_mosaic.version = 11 : i64} {
  func.func @deeponet_kernel(%arg0: i32, %arg1: memref<8x9xf32, #tpu.memory_space<vmem>>, %arg2: memref<8x32xf32, #tpu.memory_space<vmem>>, %arg3: memref<1x32xf32, #tpu.memory_space<vmem>>, %arg4: memref<32x32xf32, #tpu.memory_space<vmem>>, %arg5: memref<1x32xf32, #tpu.memory_space<vmem>>, %arg6: memref<1x32xf32, #tpu.memory_space<vmem>>, %arg7: memref<1x32xf32, #tpu.memory_space<vmem>>, %arg8: memref<32x32xf32, #tpu.memory_space<vmem>>, %arg9: memref<1x32xf32, #tpu.memory_space<vmem>>, %arg10: memref<8x32xf32, #tpu.memory_space<vmem>>, %arg11: memref<8x8xf32, #tpu.memory_space<vmem>>) attributes {dimension_semantics = [#tpu.dimension_semantics<parallel>], iteration_bounds = array<i64: 1>, scalar_prefetch = 0 : i64, scratch_operands = 0 : i64, tpu.core_type = #tpu.core_type<tc>, window_params = [{transform_indices = @transform_0, window_bounds = array<i64: 8, 9>}, {pipeline_mode = #tpu.pipeline_mode<synchronous>, transform_indices = @transform_1, window_bounds = array<i64: 8, 32>}, {pipeline_mode = #tpu.pipeline_mode<synchronous>, transform_indices = @transform_2, window_bounds = array<i64: 1, 32>}, {pipeline_mode = #tpu.pipeline_mode<synchronous>, transform_indices = @transform_3, window_bounds = array<i64: 32, 32>}, {pipeline_mode = #tpu.pipeline_mode<synchronous>, transform_indices = @transform_4, window_bounds = array<i64: 1, 32>}, {pipeline_mode = #tpu.pipeline_mode<synchronous>, transform_indices = @transform_5, window_bounds = array<i64: 1, 32>}, {pipeline_mode = #tpu.pipeline_mode<synchronous>, transform_indices = @transform_6, window_bounds = array<i64: 1, 32>}, {pipeline_mode = #tpu.pipeline_mode<synchronous>, transform_indices = @transform_7, window_bounds = array<i64: 32, 32>}, {pipeline_mode = #tpu.pipeline_mode<synchronous>, transform_indices = @transform_8, window_bounds = array<i64: 1, 32>}, {pipeline_mode = #tpu.pipeline_mode<synchronous>, transform_indices = @transform_9, window_bounds = array<i64: 8, 32>}, {transform_indices = @transform_10, window_bounds = array<i64: 8, 8>}]} {
    %c0 = arith.constant 0 : index
    %c0_0 = arith.constant 0 : index
    %0 = vector.load %arg1[%c0, %c0_0] : memref<8x9xf32, #tpu.memory_space<vmem>>, vector<8x9xf32>
    %1 = vector.extract_strided_slice %0 {offsets = [0, 0], sizes = [8, 8], strides = [1, 1]} : vector<8x9xf32> to vector<8x8xf32>
    %2 = vector.extract_strided_slice %0 {offsets = [0, 8], sizes = [8, 1], strides = [1, 1]} : vector<8x9xf32> to vector<8x1xf32>
    %c0_1 = arith.constant 0 : index
    %c0_2 = arith.constant 0 : index
    %3 = vector.load %arg2[%c0_1, %c0_2] : memref<8x32xf32, #tpu.memory_space<vmem>>, vector<8x32xf32>
    %cst = arith.constant dense<0.000000e+00> : vector<8x32xf32>
    %4 = tpu.matmul %1, %3, %cst {dimension_numbers = #tpu.dot_dimension_numbers<[1], [0], [0], [1], [0, 0, 1, 1], [], []>} : vector<8x8xf32>, vector<8x32xf32>, vector<8x32xf32> -> vector<8x32xf32>
    %c0_3 = arith.constant 0 : index
    %c0_4 = arith.constant 0 : index
    %5 = vector.load %arg3[%c0_3, %c0_4] : memref<1x32xf32, #tpu.memory_space<vmem>>, vector<1x32xf32>
    %6 = vector.broadcast %5 : vector<1x32xf32> to vector<8x32xf32>
    %7 = arith.addf %4, %6 : vector<8x32xf32>
    %8 = math.tanh %7 : vector<8x32xf32>
    %c0_5 = arith.constant 0 : index
    %c0_6 = arith.constant 0 : index
    %9 = vector.load %arg4[%c0_5, %c0_6] : memref<32x32xf32, #tpu.memory_space<vmem>>, vector<32x32xf32>
    %cst_7 = arith.constant dense<0.000000e+00> : vector<8x32xf32>
    %10 = tpu.matmul %8, %9, %cst_7 {dimension_numbers = #tpu.dot_dimension_numbers<[1], [0], [0], [1], [0, 0, 1, 1], [], []>} : vector<8x32xf32>, vector<32x32xf32>, vector<8x32xf32> -> vector<8x32xf32>
    %c0_8 = arith.constant 0 : index
    %c0_9 = arith.constant 0 : index
    %11 = vector.load %arg5[%c0_8, %c0_9] : memref<1x32xf32, #tpu.memory_space<vmem>>, vector<1x32xf32>
    %12 = vector.broadcast %11 : vector<1x32xf32> to vector<8x32xf32>
    %13 = arith.addf %10, %12 : vector<8x32xf32>
    %14 = math.tanh %13 : vector<8x32xf32>
    %c0_10 = arith.constant 0 : index
    %c0_11 = arith.constant 0 : index
    %15 = vector.load %arg6[%c0_10, %c0_11] : memref<1x32xf32, #tpu.memory_space<vmem>>, vector<1x32xf32>
    %16 = vector.broadcast %2 : vector<8x1xf32> to vector<8x32xf32>
    %17 = vector.broadcast %15 : vector<1x32xf32> to vector<8x32xf32>
    %18 = arith.mulf %16, %17 : vector<8x32xf32>
    %c0_12 = arith.constant 0 : index
    %c0_13 = arith.constant 0 : index
    %19 = vector.load %arg7[%c0_12, %c0_13] : memref<1x32xf32, #tpu.memory_space<vmem>>, vector<1x32xf32>
    %20 = vector.broadcast %19 : vector<1x32xf32> to vector<8x32xf32>
    %21 = arith.addf %18, %20 : vector<8x32xf32>
    %22 = math.tanh %21 : vector<8x32xf32>
    %c0_14 = arith.constant 0 : index
    %c0_15 = arith.constant 0 : index
    %23 = vector.load %arg8[%c0_14, %c0_15] : memref<32x32xf32, #tpu.memory_space<vmem>>, vector<32x32xf32>
    %cst_16 = arith.constant dense<0.000000e+00> : vector<8x32xf32>
    %24 = tpu.matmul %22, %23, %cst_16 {dimension_numbers = #tpu.dot_dimension_numbers<[1], [0], [0], [1], [0, 0, 1, 1], [], []>} : vector<8x32xf32>, vector<32x32xf32>, vector<8x32xf32> -> vector<8x32xf32>
    %c0_17 = arith.constant 0 : index
    %c0_18 = arith.constant 0 : index
    %25 = vector.load %arg9[%c0_17, %c0_18] : memref<1x32xf32, #tpu.memory_space<vmem>>, vector<1x32xf32>
    %26 = vector.broadcast %25 : vector<1x32xf32> to vector<8x32xf32>
    %27 = arith.addf %24, %26 : vector<8x32xf32>
    %28 = math.tanh %27 : vector<8x32xf32>
    %c0_19 = arith.constant 0 : index
    %c0_20 = arith.constant 0 : index
    %29 = vector.load %arg10[%c0_19, %c0_20] : memref<8x32xf32, #tpu.memory_space<vmem>>, vector<8x32xf32>
    %30 = arith.mulf %14, %28 : vector<8x32xf32>
    %cst_21 = arith.constant dense<0.000000e+00> : vector<8x8xf32>
    %31 = tpu.matmul %29, %30, %cst_21 {dimension_numbers = #tpu.dot_dimension_numbers<[1], [1], [0], [0], [0, 0, 1, 0], [], []>} : vector<8x32xf32>, vector<8x32xf32>, vector<8x8xf32> -> vector<8x8xf32>
    %c0_22 = arith.constant 0 : index
    %c0_23 = arith.constant 0 : index
    %32 = vector.load %arg11[%c0_22, %c0_23] : memref<8x8xf32, #tpu.memory_space<vmem>>, vector<8x8xf32>
    tpu.vector_store %arg11[%c0_22, %c0_23], %31 {strides = array<i32>} : memref<8x8xf32, #tpu.memory_space<vmem>>, vector<8x8xf32>,
    return
  }
  func.func @transform_0(%arg0: i32) -> (i32, i32) {
    %c0_i32 = arith.constant 0 : i32
    %c0_i32_0 = arith.constant 0 : i32
    return %arg0, %c0_i32 : i32, i32
  }
  func.func @transform_1(%arg0: i32) -> (i32, i32) {
    %c0_i32 = arith.constant 0 : i32
    %c0_i32_0 = arith.constant 0 : i32
    %c0_i32_1 = arith.constant 0 : i32
    return %c0_i32, %c0_i32_0 : i32, i32
  }
  func.func @transform_2(%arg0: i32) -> (i32, i32) {
    %c0_i32 = arith.constant 0 : i32
    %c0_i32_0 = arith.constant 0 : i32
    %c0_i32_1 = arith.constant 0 : i32
    return %c0_i32, %c0_i32_0 : i32, i32
  }
  func.func @transform_3(%arg0: i32) -> (i32, i32) {
    %c0_i32 = arith.constant 0 : i32
    %c0_i32_0 = arith.constant 0 : i32
    %c0_i32_1 = arith.constant 0 : i32
    return %c0_i32, %c0_i32_0 : i32, i32
  }
  func.func @transform_4(%arg0: i32) -> (i32, i32) {
    %c0_i32 = arith.constant 0 : i32
    %c0_i32_0 = arith.constant 0 : i32
    %c0_i32_1 = arith.constant 0 : i32
    return %c0_i32, %c0_i32_0 : i32, i32
  }
  func.func @transform_5(%arg0: i32) -> (i32, i32) {
    %c0_i32 = arith.constant 0 : i32
    %c0_i32_0 = arith.constant 0 : i32
    %c0_i32_1 = arith.constant 0 : i32
    return %c0_i32, %c0_i32_0 : i32, i32
  }
  func.func @transform_6(%arg0: i32) -> (i32, i32) {
    %c0_i32 = arith.constant 0 : i32
    %c0_i32_0 = arith.constant 0 : i32
    %c0_i32_1 = arith.constant 0 : i32
    return %c0_i32, %c0_i32_0 : i32, i32
  }
  func.func @transform_7(%arg0: i32) -> (i32, i32) {
    %c0_i32 = arith.constant 0 : i32
    %c0_i32_0 = arith.constant 0 : i32
    %c0_i32_1 = arith.constant 0 : i32
    return %c0_i32, %c0_i32_0 : i32, i32
  }
  func.func @transform_8(%arg0: i32) -> (i32, i32) {
    %c0_i32 = arith.constant 0 : i32
    %c0_i32_0 = arith.constant 0 : i32
    %c0_i32_1 = arith.constant 0 : i32
    return %c0_i32, %c0_i32_0 : i32, i32
  }
  func.func @transform_9(%arg0: i32) -> (i32, i32) {
    %c0_i32 = arith.constant 0 : i32
    %c0_i32_0 = arith.constant 0 : i32
    %c0_i32_1 = arith.constant 0 : i32
    return %c0_i32, %c0_i32_0 : i32, i32
  }
  func.func @transform_10(%arg0: i32) -> (i32, i32) {
    %c0_i32 = arith.constant 0 : i32
    %c0_i32_0 = arith.constant 0 : i32
    return %c0_i32, %arg0 : i32, i32
  }
}

module attributes {stable_mosaic.version = 11 : i64} {
  func.func @deeponet_kernel(%arg0: i32, %arg1: memref<8x9xf32, #tpu.memory_space<vmem>>, %arg2: memref<8x32xf32, #tpu.memory_space<vmem>>, %arg3: memref<1x32xf32, #tpu.memory_space<vmem>>, %arg4: memref<32x32xf32, #tpu.memory_space<vmem>>, %arg5: memref<1x32xf32, #tpu.memory_space<vmem>>, %arg6: memref<1x32xf32, #tpu.memory_space<vmem>>, %arg7: memref<1x32xf32, #tpu.memory_space<vmem>>, %arg8: memref<32x32xf32, #tpu.memory_space<vmem>>, %arg9: memref<1x32xf32, #tpu.memory_space<vmem>>, %arg10: memref<8x32xf32, #tpu.memory_space<vmem>>, %arg11: memref<8x8xf32, #tpu.memory_space<vmem>>) attributes {dimension_semantics = [#tpu.dimension_semantics<parallel>], iteration_bounds = array<i64: 1>, scalar_prefetch = 0 : i64, scratch_operands = 0 : i64, tpu.core_type = #tpu.core_type<tc>, window_params = [{transform_indices = @transform_0, window_bounds = array<i64: 8, 9>}, {pipeline_mode = #tpu.pipeline_mode<synchronous>, transform_indices = @transform_1, window_bounds = array<i64: 8, 32>}, {pipeline_mode = #tpu.pipeline_mode<synchronous>, transform_indices = @transform_2, window_bounds = array<i64: 1, 32>}, {pipeline_mode = #tpu.pipeline_mode<synchronous>, transform_indices = @transform_3, window_bounds = array<i64: 32, 32>}, {pipeline_mode = #tpu.pipeline_mode<synchronous>, transform_indices = @transform_4, window_bounds = array<i64: 1, 32>}, {pipeline_mode = #tpu.pipeline_mode<synchronous>, transform_indices = @transform_5, window_bounds = array<i64: 1, 32>}, {pipeline_mode = #tpu.pipeline_mode<synchronous>, transform_indices = @transform_6, window_bounds = array<i64: 1, 32>}, {pipeline_mode = #tpu.pipeline_mode<synchronous>, transform_indices = @transform_7, window_bounds = array<i64: 32, 32>}, {pipeline_mode = #tpu.pipeline_mode<synchronous>, transform_indices = @transform_8, window_bounds = array<i64: 1, 32>}, {pipeline_mode = #tpu.pipeline_mode<synchronous>, transform_indices = @transform_9, window_bounds = array<i64: 8, 32>}, {transform_indices = @transform_10, window_bounds = array<i64: 8, 8>}]} {
    %c0 = arith.constant 0 : index
    %c0_0 = arith.constant 0 : index
    %0 = vector.load %arg1[%c0, %c0_0] : memref<8x9xf32, #tpu.memory_space<vmem>>, vector<8x9xf32>
    %1 = vector.extract_strided_slice %0 {offsets = [0, 0], sizes = [8, 8], strides = [1, 1]} : vector<8x9xf32> to vector<8x8xf32>
    %2 = vector.extract_strided_slice %0 {offsets = [0, 8], sizes = [8, 1], strides = [1, 1]} : vector<8x9xf32> to vector<8x1xf32>
    %c0_1 = arith.constant 0 : index
    %c0_2 = arith.constant 0 : index
    %3 = vector.load %arg2[%c0_1, %c0_2] : memref<8x32xf32, #tpu.memory_space<vmem>>, vector<8x32xf32>
    %cst = arith.constant dense<0.000000e+00> : vector<8x32xf32>
    %4 = tpu.matmul %1, %3, %cst {dimension_numbers = #tpu.dot_dimension_numbers<[1], [0], [0], [1], [0, 0, 1, 1], [], []>} : vector<8x8xf32>, vector<8x32xf32>, vector<8x32xf32> -> vector<8x32xf32>
    %c0_3 = arith.constant 0 : index
    %c0_4 = arith.constant 0 : index
    %5 = vector.load %arg3[%c0_3, %c0_4] : memref<1x32xf32, #tpu.memory_space<vmem>>, vector<1x32xf32>
    %6 = vector.broadcast %5 : vector<1x32xf32> to vector<8x32xf32>
    %7 = arith.addf %4, %6 : vector<8x32xf32>
    %8 = math.tanh %7 : vector<8x32xf32>
    %c0_5 = arith.constant 0 : index
    %c0_6 = arith.constant 0 : index
    %9 = vector.load %arg4[%c0_5, %c0_6] : memref<32x32xf32, #tpu.memory_space<vmem>>, vector<32x32xf32>
    %cst_7 = arith.constant dense<0.000000e+00> : vector<8x32xf32>
    %10 = tpu.matmul %8, %9, %cst_7 {dimension_numbers = #tpu.dot_dimension_numbers<[1], [0], [0], [1], [0, 0, 1, 1], [], []>} : vector<8x32xf32>, vector<32x32xf32>, vector<8x32xf32> -> vector<8x32xf32>
    %c0_8 = arith.constant 0 : index
    %c0_9 = arith.constant 0 : index
    %11 = vector.load %arg5[%c0_8, %c0_9] : memref<1x32xf32, #tpu.memory_space<vmem>>, vector<1x32xf32>
    %12 = vector.broadcast %11 : vector<1x32xf32> to vector<8x32xf32>
    %13 = arith.addf %10, %12 : vector<8x32xf32>
    %14 = math.tanh %13 : vector<8x32xf32>
    %c0_10 = arith.constant 0 : index
    %c0_11 = arith.constant 0 : index
    %15 = vector.load %arg6[%c0_10, %c0_11] : memref<1x32xf32, #tpu.memory_space<vmem>>, vector<1x32xf32>
    %16 = vector.broadcast %2 : vector<8x1xf32> to vector<8x32xf32>
    %17 = vector.broadcast %15 : vector<1x32xf32> to vector<8x32xf32>
    %18 = arith.mulf %16, %17 : vector<8x32xf32>
    %c0_12 = arith.constant 0 : index
    %c0_13 = arith.constant 0 : index
    %19 = vector.load %arg7[%c0_12, %c0_13] : memref<1x32xf32, #tpu.memory_space<vmem>>, vector<1x32xf32>
    %20 = vector.broadcast %19 : vector<1x32xf32> to vector<8x32xf32>
    %21 = arith.addf %18, %20 : vector<8x32xf32>
    %22 = math.tanh %21 : vector<8x32xf32>
    %c0_14 = arith.constant 0 : index
    %c0_15 = arith.constant 0 : index
    %23 = vector.load %arg8[%c0_14, %c0_15] : memref<32x32xf32, #tpu.memory_space<vmem>>, vector<32x32xf32>
    %cst_16 = arith.constant dense<0.000000e+00> : vector<8x32xf32>
    %24 = tpu.matmul %22, %23, %cst_16 {dimension_numbers = #tpu.dot_dimension_numbers<[1], [0], [0], [1], [0, 0, 1, 1], [], []>} : vector<8x32xf32>, vector<32x32xf32>, vector<8x32xf32> -> vector<8x32xf32>
    %c0_17 = arith.constant 0 : index
    %c0_18 = arith.constant 0 : index
    %25 = vector.load %arg9[%c0_17, %c0_18] : memref<1x32xf32, #tpu.memory_space<vmem>>, vector<1x32xf32>
    %26 = vector.broadcast %25 : vector<1x32xf32> to vector<8x32xf32>
    %27 = arith.addf %24, %26 : vector<8x32xf32>
    %28 = math.tanh %27 : vector<8x32xf32>
    %c0_19 = arith.constant 0 : index
    %c0_20 = arith.constant 0 : index
    %29 = vector.load %arg10[%c0_19, %c0_20] : memref<8x32xf32, #tpu.memory_space<vmem>>, vector<8x32xf32>
    %30 = arith.mulf %14, %28 : vector<8x32xf32>
    %cst_21 = arith.constant dense<0.000000e+00> : vector<8x8xf32>
    %31 = tpu.matmul %29, %30, %cst_21 {dimension_numbers = #tpu.dot_dimension_numbers<[1], [1], [0], [0], [0, 0, 1, 0], [], []>} : vector<8x32xf32>, vector<8x32xf32>, vector<8x8xf32> -> vector<8x8xf32>
    %c0_22 = arith.constant 0 : index
    %c0_23 = arith.constant 0 : index
    %32 = vector.load %arg11[%c0_22, %c0_23] : memref<8x8xf32, #tpu.memory_space<vmem>>, vector<8x8xf32>
    tpu.vector_store %arg11[%c0_22, %c0_23], %31 {strides = array<i32>} : memref<8x8xf32, #tpu.memory_space<vmem>>, vector<8x8xf32>,
    return
  }
  func.func @transform_0(%arg0: i32) -> (i32, i32) {
    %c0_i32 = arith.constant 0 : i32
    %c0_i32_0 = arith.constant 0 : i32
    return %arg0, %c0_i32 : i32, i32
  }
  func.func @transform_1(%arg0: i32) -> (i32, i32) {
    %c0_i32 = arith.constant 0 : i32
    %c0_i32_0 = arith.constant 0 : i32
    %c0_i32_1 = arith.constant 0 : i32
    return %c0_i32, %c0_i32_0 : i32, i32
  }
  func.func @transform_2(%arg0: i32) -> (i32, i32) {
    %c0_i32 = arith.constant 0 : i32
    %c0_i32_0 = arith.constant 0 : i32
    %c0_i32_1 = arith.constant 0 : i32
    return %c0_i32, %c0_i32_0 : i32, i32
  }
  func.func @transform_3(%arg0: i32) -> (i32, i32) {
    %c0_i32 = arith.constant 0 : i32
    %c0_i32_0 = arith.constant 0 : i32
    %c0_i32_1 = arith.constant 0 : i32
    return %c0_i32, %c0_i32_0 : i32, i32
  }
  func.func @transform_4(%arg0: i32) -> (i32, i32) {
    %c0_i32 = arith.constant 0 : i32
    %c0_i32_0 = arith.constant 0 : i32
    %c0_i32_1 = arith.constant 0 : i32
    return %c0_i32, %c0_i32_0 : i32, i32
  }
  func.func @transform_5(%arg0: i32) -> (i32, i32) {
    %c0_i32 = arith.constant 0 : i32
    %c0_i32_0 = arith.constant 0 : i32
    %c0_i32_1 = arith.constant 0 : i32
    return %c0_i32, %c0_i32_0 : i32, i32
  }
  func.func @transform_6(%arg0: i32) -> (i32, i32) {
    %c0_i32 = arith.constant 0 : i32
    %c0_i32_0 = arith.constant 0 : i32
    %c0_i32_1 = arith.constant 0 : i32
    return %c0_i32, %c0_i32_0 : i32, i32
  }
  func.func @transform_7(%arg0: i32) -> (i32, i32) {
    %c0_i32 = arith.constant 0 : i32
    %c0_i32_0 = arith.constant 0 : i32
    %c0_i32_1 = arith.constant 0 : i32
    return %c0_i32, %c0_i32_0 : i32, i32
  }
  func.func @transform_8(%arg0: i32) -> (i32, i32) {
    %c0_i32 = arith.constant 0 : i32
    %c0_i32_0 = arith.constant 0 : i32
    %c0_i32_1 = arith.constant 0 : i32
    return %c0_i32, %c0_i32_0 : i32, i32
  }
  func.func @transform_9(%arg0: i32) -> (i32, i32) {
    %c0_i32 = arith.constant 0 : i32
    %c0_i32_0 = arith.constant 0 : i32
    %c0_i32_1 = arith.constant 0 : i32
    return %c0_i32, %c0_i32_0 : i32, i32
  }
  func.func @transform_10(%arg0: i32) -> (i32, i32) {
    %c0_i32 = arith.constant 0 : i32
    %c0_i32_0 = arith.constant 0 : i32
    return %c0_i32, %arg0 : i32, i32
  }
}

</mosaic_0001>

<llo_original>
// kernel: tpu_custom_call.1
$region0: #{tpu_custom_call.1}
  #allocation0 [shape = 'u32[]', space=smem, size = 0x4, offset = 0x4, fixed_abs, tag = 'smem constant byte address 0x4 - core index']
  #allocation1 [shape = 'u32[144,128]{1,0:T(1,128)}', space=vmem, size = 0x12000, scoped, tag = 'internal scratch']
  %s0 = inlined_call_operand.hbm [shape: f32[8,9], index: 0, kind: input, shape index: {}]
  %s1 = inlined_call_operand.hbm [shape: f32[8,32], index: 1, kind: input, shape index: {}]
  %s2 = inlined_call_operand.vmem [shape: f32[1,32], index: 2, kind: input, shape index: {}]
  %s3 = inlined_call_operand.hbm [shape: f32[32,32], index: 3, kind: input, shape index: {}]
  %s4 = inlined_call_operand.vmem [shape: f32[1,32], index: 4, kind: input, shape index: {}]
  %s5 = inlined_call_operand.vmem [shape: f32[1,32], index: 5, kind: input, shape index: {}]
  %s6 = inlined_call_operand.vmem [shape: f32[1,32], index: 6, kind: input, shape index: {}]
  %s7 = inlined_call_operand.hbm [shape: f32[32,32], index: 7, kind: input, shape index: {}]
  %s8 = inlined_call_operand.vmem [shape: f32[1,32], index: 8, kind: input, shape index: {}]
  %s9 = inlined_call_operand.vmem [shape: f32[8,32], index: 9, kind: input, shape index: {}]
  %s10 = inlined_call_operand.hbm [shape: f32[8,8], index: 10, kind: output, shape index: {}]
  %s11 = sld [smem:[#allocation0]]
  $region66: #{tpu_custom_call.1} parent=0
    _
  %s13 = ssub.s32 1, %s11
  %s14 = scalar_select 0, %s13, %s11
  $region1: #{tpu_custom_call.1} parent=0
    #allocation2 [shape = 'u8[4096]{0}', space=vmem, size = 0x1000, scoped, tag = 'input window, operand 0, single buffered']
    #allocation3 [shape = 's32[1]{0}', space=sflag, size = 0x4, scoped, tag = 'scoped memory for tpu_custom_call.1']
    #allocation4 [shape = 's32[1]{0}', space=sflag, size = 0x4, scoped, tag = 'scoped memory for tpu_custom_call.1']
    #allocation5 [shape = 'u8[4096]{0}', space=vmem, size = 0x1000, scoped, tag = 'input window, operand 1, single buffered']
    #allocation6 [shape = 's32[1]{0}', space=sflag, size = 0x4, scoped, tag = 'scoped memory for tpu_custom_call.1']
    #allocation7 [shape = 'u8[16384]{0}', space=vmem, size = 0x4000, scoped, tag = 'input window, operand 3, single buffered']
    #allocation8 [shape = 'u8[16384]{0}', space=vmem, size = 0x4000, scoped, tag = 'input window, operand 7, single buffered']
    #allocation9 [shape = 's32[1]{0}', space=sflag, size = 0x4, scoped, tag = 'scoped memory for tpu_custom_call.1']
    #allocation10 [shape = 'u8[4096]{0}', space=vmem, size = 0x1000, scoped, tag = 'output window, operand 0, single buffered']
    %15 = vsyncpa [#allocation3], 0
    %16 = vsyncpa [#allocation6], 0
    %17 = vsyncpa [#allocation9], 0
    %18 = vsyncpa [#allocation4], 0
    // Predicated region
    $region2: #{tpu_custom_call.1} parent=1 // pred_check
      _
    $region3: #{tpu_custom_call.1} parent=1 // pred_check_branch
      %20 = sbr.rel (0) target = $region5
    $region4: #{tpu_custom_call.1} parent=1 // pred_region
      %s22 = ssub.s32 128, 128
      %23 = vsyncadd [#allocation3], %s22
      %s25 = sshll.u32 [#allocation2], 4
      %s26 = int_to_ptr.vmem [resolvable:$true] %s25
      %28 = dma.hbm_to_vmem [thread:$0]  %s0, 128, %s26, [#allocation3]
    $region5: #{tpu_custom_call.1} parent=1 // pred_fallthru
      _
    // Predicated region
    $region6: #{tpu_custom_call.1} parent=1 // pred_check
      _
    $region7: #{tpu_custom_call.1} parent=1 // pred_check_branch
      %30 = sbr.rel (0) target = $region9
    $region8: #{tpu_custom_call.1} parent=1 // pred_region
      %s32 = ssub.s32 128, 128
      %33 = vsyncadd [#allocation6], %s32
      %s35 = sshll.u32 [#allocation5], 4
      %s36 = int_to_ptr.vmem [resolvable:$true] %s35
      %38 = dma.hbm_to_vmem [thread:$0]  %s1, 128, %s36, [#allocation6]
    $region9: #{tpu_custom_call.1} parent=1 // pred_fallthru
      _
    // Predicated region
    $region10: #{tpu_custom_call.1} parent=1 // pred_check
      _
    $region11: #{tpu_custom_call.1} parent=1 // pred_check_branch
      %40 = sbr.rel (0) target = $region13
    $region12: #{tpu_custom_call.1} parent=1 // pred_region
      _
    $region13: #{tpu_custom_call.1} parent=1 // pred_fallthru
      _
    // Predicated region
    $region14: #{tpu_custom_call.1} parent=1 // pred_check
      _
    $region15: #{tpu_custom_call.1} parent=1 // pred_check_branch
      %42 = sbr.rel (0) target = $region17
    $region16: #{tpu_custom_call.1} parent=1 // pred_region
      %s44 = ssub.s32 512, 512
      %45 = vsyncadd [#allocation6], %s44
      %s46 = sshll.u32 [#allocation7], 4
      %s47 = int_to_ptr.vmem [resolvable:$true] %s46
      %52 = dma.hbm_to_vmem [thread:$0]  %s3, 512, %s47, [#allocation6], 128, 128, 8
    $region17: #{tpu_custom_call.1} parent=1 // pred_fallthru
      _
    // Predicated region
    $region18: #{tpu_custom_call.1} parent=1 // pred_check
      _
    $region19: #{tpu_custom_call.1} parent=1 // pred_check_branch
      %54 = sbr.rel (0) target = $region21
    $region20: #{tpu_custom_call.1} parent=1 // pred_region
      _
    $region21: #{tpu_custom_call.1} parent=1 // pred_fallthru
      _
    // Predicated region
    $region22: #{tpu_custom_call.1} parent=1 // pred_check
      _
    $region23: #{tpu_custom_call.1} parent=1 // pred_check_branch
      %56 = sbr.rel (0) target = $region25
    $region24: #{tpu_custom_call.1} parent=1 // pred_region
      _
    $region25: #{tpu_custom_call.1} parent=1 // pred_fallthru
      _
    // Predicated region
    $region26: #{tpu_custom_call.1} parent=1 // pred_check
      _
    $region27: #{tpu_custom_call.1} parent=1 // pred_check_branch
      %58 = sbr.rel (0) target = $region29
    $region28: #{tpu_custom_call.1} parent=1 // pred_region
      _
    $region29: #{tpu_custom_call.1} parent=1 // pred_fallthru
      _
    // Predicated region
    $region30: #{tpu_custom_call.1} parent=1 // pred_check
      _
    $region31: #{tpu_custom_call.1} parent=1 // pred_check_branch
      %60 = sbr.rel (0) target = $region33
    $region32: #{tpu_custom_call.1} parent=1 // pred_region
      %s62 = ssub.s32 512, 512
      %63 = vsyncadd [#allocation9], %s62
      %s64 = sshll.u32 [#allocation8], 4
      %s65 = int_to_ptr.vmem [resolvable:$true] %s64
      %70 = dma.hbm_to_vmem [thread:$0]  %s7, 512, %s65, [#allocation9], 128, 128, 8
    $region33: #{tpu_custom_call.1} parent=1 // pred_fallthru
      _
    // Predicated region
    $region34: #{tpu_custom_call.1} parent=1 // pred_check
      _
    $region35: #{tpu_custom_call.1} parent=1 // pred_check_branch
      %72 = sbr.rel (0) target = $region37
    $region36: #{tpu_custom_call.1} parent=1 // pred_region
      _
    $region37: #{tpu_custom_call.1} parent=1 // pred_fallthru
      _
    // Predicated region
    $region38: #{tpu_custom_call.1} parent=1 // pred_check
      _
    $region39: #{tpu_custom_call.1} parent=1 // pred_check_branch
      %74 = sbr.rel (0) target = $region41
    $region40: #{tpu_custom_call.1} parent=1 // pred_region
      _
    $region41: #{tpu_custom_call.1} parent=1 // pred_fallthru
      _
    // Predicated region
    $region42: #{tpu_custom_call.1} parent=1 // pred_check
      _
    $region43: #{tpu_custom_call.1} parent=1 // pred_check_branch
      %76 = sbr.rel (0) target = $region45
    $region44: #{tpu_custom_call.1} parent=1 // pred_region
      %77 = dma.done [#allocation3], 128
    $region45: #{tpu_custom_call.1} parent=1 // pred_fallthru
      _
    // Predicated region
    $region46: #{tpu_custom_call.1} parent=1 // pred_check
      _
    $region47: #{tpu_custom_call.1} parent=1 // pred_check_branch
      %79 = sbr.rel (0) target = $region49
    $region48: #{tpu_custom_call.1} parent=1 // pred_region
      %80 = dma.done [#allocation6], 128
    $region49: #{tpu_custom_call.1} parent=1 // pred_fallthru
      _
    // Predicated region
    $region50: #{tpu_custom_call.1} parent=1 // pred_check
      _
    $region51: #{tpu_custom_call.1} parent=1 // pred_check_branch
      %82 = sbr.rel (0) target = $region53
    $region52: #{tpu_custom_call.1} parent=1 // pred_region
      %83 = dma.done [#allocation6], 512
    $region53: #{tpu_custom_call.1} parent=1 // pred_fallthru
      _
    // Predicated region
    $region54: #{tpu_custom_call.1} parent=1 // pred_check
      _
    $region55: #{tpu_custom_call.1} parent=1 // pred_check_branch
      %85 = sbr.rel (0) target = $region57
    $region56: #{tpu_custom_call.1} parent=1 // pred_region
      %86 = dma.done [#allocation9], 512
    $region57: #{tpu_custom_call.1} parent=1 // pred_fallthru
      _
    %v87 = vld [vmem:[#allocation2] sm:$0xff]
    %v88 = vld [vmem:[#allocation5] sm:$0xff]
    %v89 = vld [vmem:[%s2] sm:$0x1]
    %v91 = vlaneseq
    %v92 = vshrl.u32 %v91, 7
    %v93 = vsub.s32 0, %v92
    %v94 = vrot.slane %v89, %v93
    %vm96 = vcmask 64512
    %v98 = vsel %vm96, %v87, 0
    %100 = vmatprep.subr.mxu0 0.0
    %101 = vmatpush1.msra.mxu0 %v88
    %102 = vmatprep.subr.mxu0 0.0
    %103 = vmatpush1.msra.mxu0 0.0
    %104 = vmatprep.subr.mxu0 0.0
    %105 = vmatpush1.msra.mxu0 0.0
    %106 = vmatprep.subr.mxu0 0.0
    %107 = vmatpush1.msra.mxu0 0.0
    %108 = vmatprep.subr.mxu0 0.0
    %109 = vmatpush1.msra.mxu0 0.0
    %110 = vmatprep.subr.mxu0 0.0
    %111 = vmatpush1.msra.mxu0 0.0
    %112 = vmatprep.subr.mxu0 0.0
    %113 = vmatpush1.msra.mxu0 0.0
    %114 = vmatprep.subr.mxu0 0.0
    %115 = vmatpush1.msra.mxu0 0.0
    %116 = vmatprep.subr.mxu0 0.0
    %117 = vmatpush1.msra.mxu0 0.0
    %118 = vmatprep.subr.mxu0 0.0
    %119 = vmatpush1.msra.mxu0 0.0
    %120 = vmatprep.subr.mxu0 0.0
    %121 = vmatpush1.msra.mxu0 0.0
    %122 = vmatprep.subr.mxu0 0.0
    %123 = vmatpush1.msra.mxu0 0.0
    %124 = vmatprep.subr.mxu0 0.0
    %125 = vmatpush1.msra.mxu0 0.0
    %126 = vmatprep.subr.mxu0 0.0
    %127 = vmatpush1.msra.mxu0 0.0
    %128 = vmatprep.subr.mxu0 0.0
    %129 = vmatpush1.msra.mxu0 0.0
    %130 = vmatprep.subr.mxu0 0.0
    %131 = vmatpush1.msra.mxu0 0.0
    %132 = vmatprep.subr.mxu0 0.0
    %133 = vmatpush1.msra.mxu0 0.0
    %134 = vmatprep.subr.mxu0 0.0
    %135 = vmatpush1.msra.mxu0 0.0
    %136 = vmatprep.subr.mxu0 0.0
    %137 = vmatpush1.msra.mxu0 0.0
    %138 = vmatprep.subr.mxu0 0.0
    %139 = vmatpush1.msra.mxu0 0.0
    %140 = vmatprep.subr.mxu0 0.0
    %141 = vmatpush1.msra.mxu0 0.0
    %142 = vmatprep.subr.mxu0 0.0
    %143 = vmatpush1.msra.mxu0 0.0
    %144 = vmatprep.subr.mxu0 0.0
    %145 = vmatpush1.msra.mxu0 0.0
    %146 = vmatprep.subr.mxu0 0.0
    %147 = vmatpush1.msra.mxu0 0.0
    %148 = vmatprep.subr.mxu0 0.0
    %149 = vmatpush1.msra.mxu0 0.0
    %150 = vmatprep.subr.mxu0 0.0
    %151 = vmatpush1.msra.mxu0 0.0
    %152 = vmatprep.subr.mxu0 0.0
    %153 = vmatpush1.msra.mxu0 0.0
    %154 = vmatprep.subr.mxu0 0.0
    %155 = vmatpush1.msra.mxu0 0.0
    %156 = vmatprep.subr.mxu0 0.0
    %157 = vmatpush1.msra.mxu0 0.0
    %158 = vmatprep.subr.mxu0 0.0
    %159 = vmatpush1.msra.mxu0 0.0
    %160 = vmatprep.subr.mxu0 0.0
    %161 = vmatpush1.msra.mxu0 0.0
    %162 = vmatprep.subr.mxu0 0.0
    %163 = vmatpush1.msra.mxu0 0.0
    %164 = vmatprep.mubr.f32.mxu0 0.0
    %165 = vmatmul.mubr.f32.gmra.mrb[0].mxu0 %v98
    %v166 = vpop.f32.mrb[0].mxu0
    %v167 = vadd.f32 %v94, %v166
    %v168 = vpop.f32.mrb[0].mxu0
    %169 = vdwg.mxu0
    %v170 = vtanh.pop %v167
    %v171 = vld [vmem:[#allocation7] sm:$0xff]
    %v172 = vld [vmem:[#allocation7 + $0x8] sm:$0xff]
    %v173 = vld [vmem:[#allocation7 + $0x10] sm:$0xff]
    %v174 = vld [vmem:[#allocation7 + $0x18] sm:$0xff]
    %v175 = vld [vmem:[%s4] sm:$0x1]
    %v177 = vlaneseq
    %v178 = vshrl.u32 %v177, 7
    %v179 = vsub.s32 0, %v178
    %v180 = vrot.slane %v175, %v179
    %vm182 = vcmask 261120
    %v184 = vsel %vm182, %v170, 0
    %186 = vmatprep.subr.mxu0 0.0
    %187 = vmatpush1.msra.mxu0 %v171
    %188 = vmatprep.subr.mxu0 0.0
    %189 = vmatpush1.msra.mxu0 %v172
    %190 = vmatprep.subr.mxu0 0.0
    %191 = vmatpush1.msra.mxu0 %v173
    %192 = vmatprep.subr.mxu0 0.0
    %193 = vmatpush1.msra.mxu0 %v174
    %194 = vmatprep.subr.mxu0 0.0
    %195 = vmatpush1.msra.mxu0 0.0
    %196 = vmatprep.subr.mxu0 0.0
    %197 = vmatpush1.msra.mxu0 0.0
    %198 = vmatprep.subr.mxu0 0.0
    %199 = vmatpush1.msra.mxu0 0.0
    %200 = vmatprep.subr.mxu0 0.0
    %201 = vmatpush1.msra.mxu0 0.0
    %202 = vmatprep.subr.mxu0 0.0
    %203 = vmatpush1.msra.mxu0 0.0
    %204 = vmatprep.subr.mxu0 0.0
    %205 = vmatpush1.msra.mxu0 0.0
    %206 = vmatprep.subr.mxu0 0.0
    %207 = vmatpush1.msra.mxu0 0.0
    %208 = vmatprep.subr.mxu0 0.0
    %209 = vmatpush1.msra.mxu0 0.0
    %210 = vmatprep.subr.mxu0 0.0
    %211 = vmatpush1.msra.mxu0 0.0
    %212 = vmatprep.subr.mxu0 0.0
    %213 = vmatpush1.msra.mxu0 0.0
    %214 = vmatprep.subr.mxu0 0.0
    %215 = vmatpush1.msra.mxu0 0.0
    %216 = vmatprep.subr.mxu0 0.0
    %217 = vmatpush1.msra.mxu0 0.0
    %218 = vmatprep.subr.mxu0 0.0
    %219 = vmatpush1.msra.mxu0 0.0
    %220 = vmatprep.subr.mxu0 0.0
    %221 = vmatpush1.msra.mxu0 0.0
    %222 = vmatprep.subr.mxu0 0.0
    %223 = vmatpush1.msra.mxu0 0.0
    %224 = vmatprep.subr.mxu0 0.0
    %225 = vmatpush1.msra.mxu0 0.0
    %226 = vmatprep.subr.mxu0 0.0
    %227 = vmatpush1.msra.mxu0 0.0
    %228 = vmatprep.subr.mxu0 0.0
    %229 = vmatpush1.msra.mxu0 0.0
    %230 = vmatprep.subr.mxu0 0.0
    %231 = vmatpush1.msra.mxu0 0.0
    %232 = vmatprep.subr.mxu0 0.0
    %233 = vmatpush1.msra.mxu0 0.0
    %234 = vmatprep.subr.mxu0 0.0
    %235 = vmatpush1.msra.mxu0 0.0
    %236 = vmatprep.subr.mxu0 0.0
    %237 = vmatpush1.msra.mxu0 0.0
    %238 = vmatprep.subr.mxu0 0.0
    %239 = vmatpush1.msra.mxu0 0.0
    %240 = vmatprep.subr.mxu0 0.0
    %241 = vmatpush1.msra.mxu0 0.0
    %242 = vmatprep.subr.mxu0 0.0
    %243 = vmatpush1.msra.mxu0 0.0
    %244 = vmatprep.subr.mxu0 0.0
    %245 = vmatpush1.msra.mxu0 0.0
    %246 = vmatprep.subr.mxu0 0.0
    %247 = vmatpush1.msra.mxu0 0.0
    %248 = vmatprep.subr.mxu0 0.0
    %249 = vmatpush1.msra.mxu0 0.0
    %250 = vmatprep.mubr.f32.mxu0 0.0
    %251 = vmatmul.mubr.f32.gmra.mrb[0].mxu0 %v184
    %v252 = vpop.f32.mrb[0].mxu0
    %v253 = vadd.f32 %v180, %v252
    %v254 = vpop.f32.mrb[0].mxu0
    %255 = vdwg.mxu0
    %v256 = vtanh.pop %v253
    %v257 = vld [vmem:[%s5] sm:$0x1]
    %258 = vset.pattern.permute.xlu0 8
    %259 = vperm.xlu0 %258, %v87
    %v260 = vpop.permute.xlu0 %259
    %v263 = vlaneseq
    %v264 = vshrl.u32 %v263, 7
    %v265 = vsub.s32 0, %v264
    %v266 = vrot.slane %v257, %v265
    %v268 = vmul.f32 %v260, %v266
    %v269 = vld [vmem:[%s6] sm:$0x1]
    %v271 = vlaneseq
    %v272 = vshrl.u32 %v271, 7
    %v273 = vsub.s32 0, %v272
    %v274 = vrot.slane %v269, %v273
    %v276 = vadd.f32 %v268, %v274
    %v277 = vtanh.pop %v276
    %v278 = vld [vmem:[#allocation8] sm:$0xff]
    %v279 = vld [vmem:[#allocation8 + $0x8] sm:$0xff]
    %v280 = vld [vmem:[#allocation8 + $0x10] sm:$0xff]
    %v281 = vld [vmem:[#allocation8 + $0x18] sm:$0xff]
    %v282 = vld [vmem:[%s8] sm:$0x1]
    %v284 = vlaneseq
    %v285 = vshrl.u32 %v284, 7
    %v286 = vsub.s32 0, %v285
    %v287 = vrot.slane %v282, %v286
    %v290 = vsel %vm182, %v277, 0
    %292 = vmatprep.subr.mxu0 0.0
    %293 = vmatpush1.msra.mxu0 %v278
    %294 = vmatprep.subr.mxu0 0.0
    %295 = vmatpush1.msra.mxu0 %v279
    %296 = vmatprep.subr.mxu0 0.0
    %297 = vmatpush1.msra.mxu0 %v280
    %298 = vmatprep.subr.mxu0 0.0
    %299 = vmatpush1.msra.mxu0 %v281
    %300 = vmatprep.subr.mxu0 0.0
    %301 = vmatpush1.msra.mxu0 0.0
    %302 = vmatprep.subr.mxu0 0.0
    %303 = vmatpush1.msra.mxu0 0.0
    %304 = vmatprep.subr.mxu0 0.0
    %305 = vmatpush1.msra.mxu0 0.0
    %306 = vmatprep.subr.mxu0 0.0
    %307 = vmatpush1.msra.mxu0 0.0
    %308 = vmatprep.subr.mxu0 0.0
    %309 = vmatpush1.msra.mxu0 0.0
    %310 = vmatprep.subr.mxu0 0.0
    %311 = vmatpush1.msra.mxu0 0.0
    %312 = vmatprep.subr.mxu0 0.0
    %313 = vmatpush1.msra.mxu0 0.0
    %314 = vmatprep.subr.mxu0 0.0
    %315 = vmatpush1.msra.mxu0 0.0
    %316 = vmatprep.subr.mxu0 0.0
    %317 = vmatpush1.msra.mxu0 0.0
    %318 = vmatprep.subr.mxu0 0.0
    %319 = vmatpush1.msra.mxu0 0.0
    %320 = vmatprep.subr.mxu0 0.0
    %321 = vmatpush1.msra.mxu0 0.0
    %322 = vmatprep.subr.mxu0 0.0
    %323 = vmatpush1.msra.mxu0 0.0
    %324 = vmatprep.subr.mxu0 0.0
    %325 = vmatpush1.msra.mxu0 0.0
    %326 = vmatprep.subr.mxu0 0.0
    %327 = vmatpush1.msra.mxu0 0.0
    %328 = vmatprep.subr.mxu0 0.0
    %329 = vmatpush1.msra.mxu0 0.0
    %330 = vmatprep.subr.mxu0 0.0
    %331 = vmatpush1.msra.mxu0 0.0
    %332 = vmatprep.subr.mxu0 0.0
    %333 = vmatpush1.msra.mxu0 0.0
    %334 = vmatprep.subr.mxu0 0.0
    %335 = vmatpush1.msra.mxu0 0.0
    %336 = vmatprep.subr.mxu0 0.0
    %337 = vmatpush1.msra.mxu0 0.0
    %338 = vmatprep.subr.mxu0 0.0
    %339 = vmatpush1.msra.mxu0 0.0
    %340 = vmatprep.subr.mxu0 0.0
    %341 = vmatpush1.msra.mxu0 0.0
    %342 = vmatprep.subr.mxu0 0.0
    %343 = vmatpush1.msra.mxu0 0.0
    %344 = vmatprep.subr.mxu0 0.0
    %345 = vmatpush1.msra.mxu0 0.0
    %346 = vmatprep.subr.mxu0 0.0
    %347 = vmatpush1.msra.mxu0 0.0
    %348 = vmatprep.subr.mxu0 0.0
    %349 = vmatpush1.msra.mxu0 0.0
    %350 = vmatprep.subr.mxu0 0.0
    %351 = vmatpush1.msra.mxu0 0.0
    %352 = vmatprep.subr.mxu0 0.0
    %353 = vmatpush1.msra.mxu0 0.0
    %354 = vmatprep.subr.mxu0 0.0
    %355 = vmatpush1.msra.mxu0 0.0
    %356 = vmatprep.mubr.f32.mxu0 0.0
    %357 = vmatmul.mubr.f32.gmra.mrb[0].mxu0 %v290
    %v358 = vpop.f32.mrb[0].mxu0
    %v359 = vadd.f32 %v287, %v358
    %v360 = vpop.f32.mrb[0].mxu0
    %361 = vdwg.mxu0
    %v362 = vtanh.pop %v359
    %v363 = vld [vmem:[%s9] sm:$0xff]
    %v364 = vmul.f32 %v256, %v362
    %v366 = vsel %vm182, %v363, 0
    %v369 = vsel %vm182, %v364, 0
    %371 = vmatprep.subr.mxu0 0.0
    %372 = vmatpush1.xpose.msra.mxu0 %v369
    %373 = vmatprep.subr.mxu0 0.0
    %374 = vmatpush1.xpose.msra.mxu0 0.0
    %375 = vmatprep.subr.mxu0 0.0
    %376 = vmatpush1.xpose.msra.mxu0 0.0
    %377 = vmatprep.subr.mxu0 0.0
    %378 = vmatpush1.xpose.msra.mxu0 0.0
    %379 = vmatprep.subr.mxu0 0.0
    %380 = vmatpush1.xpose.msra.mxu0 0.0
    %381 = vmatprep.subr.mxu0 0.0
    %382 = vmatpush1.xpose.msra.mxu0 0.0
    %383 = vmatprep.subr.mxu0 0.0
    %384 = vmatpush1.xpose.msra.mxu0 0.0
    %385 = vmatprep.subr.mxu0 0.0
    %386 = vmatpush1.xpose.msra.mxu0 0.0
    %387 = vmatprep.subr.mxu0 0.0
    %388 = vmatpush1.xpose.msra.mxu0 0.0
    %389 = vmatprep.subr.mxu0 0.0
    %390 = vmatpush1.xpose.msra.mxu0 0.0
    %391 = vmatprep.subr.mxu0 0.0
    %392 = vmatpush1.xpose.msra.mxu0 0.0
    %393 = vmatprep.subr.mxu0 0.0
    %394 = vmatpush1.xpose.msra.mxu0 0.0
    %395 = vmatprep.subr.mxu0 0.0
    %396 = vmatpush1.xpose.msra.mxu0 0.0
    %397 = vmatprep.subr.mxu0 0.0
    %398 = vmatpush1.xpose.msra.mxu0 0.0
    %399 = vmatprep.subr.mxu0 0.0
    %400 = vmatpush1.xpose.msra.mxu0 0.0
    %401 = vmatprep.subr.mxu0 0.0
    %402 = vmatpush1.xpose.msra.mxu0 0.0
    %403 = vmatprep.subr.mxu0 0.0
    %404 = vmatpush1.xpose.msra.mxu0 0.0
    %405 = vmatprep.subr.mxu0 0.0
    %406 = vmatpush1.xpose.msra.mxu0 0.0
    %407 = vmatprep.subr.mxu0 0.0
    %408 = vmatpush1.xpose.msra.mxu0 0.0
    %409 = vmatprep.subr.mxu0 0.0
    %410 = vmatpush1.xpose.msra.mxu0 0.0
    %411 = vmatprep.subr.mxu0 0.0
    %412 = vmatpush1.xpose.msra.mxu0 0.0
    %413 = vmatprep.subr.mxu0 0.0
    %414 = vmatpush1.xpose.msra.mxu0 0.0
    %415 = vmatprep.subr.mxu0 0.0
    %416 = vmatpush1.xpose.msra.mxu0 0.0
    %417 = vmatprep.subr.mxu0 0.0
    %418 = vmatpush1.xpose.msra.mxu0 0.0
    %419 = vmatprep.subr.mxu0 0.0
    %420 = vmatpush1.xpose.msra.mxu0 0.0
    %421 = vmatprep.subr.mxu0 0.0
    %422 = vmatpush1.xpose.msra.mxu0 0.0
    %423 = vmatprep.subr.mxu0 0.0
    %424 = vmatpush1.xpose.msra.mxu0 0.0
    %425 = vmatprep.subr.mxu0 0.0
    %426 = vmatpush1.xpose.msra.mxu0 0.0
    %427 = vmatprep.subr.mxu0 0.0
    %428 = vmatpush1.xpose.msra.mxu0 0.0
    %429 = vmatprep.subr.mxu0 0.0
    %430 = vmatpush1.xpose.msra.mxu0 0.0
    %431 = vmatprep.subr.mxu0 0.0
    %432 = vmatpush1.xpose.msra.mxu0 0.0
    %433 = vmatprep.subr.mxu0 0.0
    %434 = vmatpush1.xpose.msra.mxu0 0.0
    %435 = vmatprep.mubr.f32.mxu0 0.0
    %436 = vmatmul.mubr.f32.gmra.mrb[0].mxu0 %v366
    %v437 = vpop.f32.mrb[0].mxu0
    %v438 = vadd.f32 0.0, %v437
    %v439 = vpop.f32.mrb[0].mxu0
    %440 = vdwg.mxu0
    %441 = vst.msk [vmem:[#allocation10] sm:$0xff] %vm96, %v438
    // Predicated region
    $region58: #{tpu_custom_call.1} parent=1 // pred_check
      _
    $region59: #{tpu_custom_call.1} parent=1 // pred_check_branch
      %443 = sbr.rel (0) target = $region61
    $region60: #{tpu_custom_call.1} parent=1 // pred_region
      %s445 = ssub.s32 128, 128
      %446 = vsyncadd [#allocation4], %s445
      %s448 = sshll.u32 [#allocation10], 4
      %s449 = int_to_ptr.vmem [resolvable:$true] %s448
      %451 = dma.vmem_to_hbm [thread:$0]  %s449, 128, %s10, [#allocation4]
    $region61: #{tpu_custom_call.1} parent=1 // pred_fallthru
      _
    // Predicated region
    $region62: #{tpu_custom_call.1} parent=1 // pred_check
      _
    $region63: #{tpu_custom_call.1} parent=1 // pred_check_branch
      %453 = sbr.rel (0) target = $region65
    $region64: #{tpu_custom_call.1} parent=1 // pred_region
      %454 = dma.done [#allocation4], 128
    $region65: #{tpu_custom_call.1} parent=1 // pred_fallthru
      _
    %455 = vsyncpa [#allocation3], 1
    %456 = vsyncpa [#allocation6], 1
    %457 = vsyncpa [#allocation9], 1
    %458 = vsyncpa [#allocation4], 1

// kernel: tpu_custom_call.1
$region0: #{tpu_custom_call.1}
  #allocation0 [shape = 'u32[]', space=smem, size = 0x4, offset = 0x4, fixed_abs, tag = 'smem constant byte address 0x4 - core index']
  #allocation1 [shape = 'u32[144,128]{1,0:T(1,128)}', space=vmem, size = 0x12000, scoped, tag = 'internal scratch']
  %s0 = inlined_call_operand.hbm [shape: f32[8,9], index: 0, kind: input, shape index: {}]
  %s1 = inlined_call_operand.hbm [shape: f32[8,32], index: 1, kind: input, shape index: {}]
  %s2 = inlined_call_operand.vmem [shape: f32[1,32], index: 2, kind: input, shape index: {}]
  %s3 = inlined_call_operand.hbm [shape: f32[32,32], index: 3, kind: input, shape index: {}]
  %s4 = inlined_call_operand.vmem [shape: f32[1,32], index: 4, kind: input, shape index: {}]
  %s5 = inlined_call_operand.vmem [shape: f32[1,32], index: 5, kind: input, shape index: {}]
  %s6 = inlined_call_operand.vmem [shape: f32[1,32], index: 6, kind: input, shape index: {}]
  %s7 = inlined_call_operand.hbm [shape: f32[32,32], index: 7, kind: input, shape index: {}]
  %s8 = inlined_call_operand.vmem [shape: f32[1,32], index: 8, kind: input, shape index: {}]
  %s9 = inlined_call_operand.vmem [shape: f32[8,32], index: 9, kind: input, shape index: {}]
  %s10 = inlined_call_operand.hbm [shape: f32[8,8], index: 10, kind: output, shape index: {}]
  %s11 = sld [smem:[#allocation0]]
  $region66: #{tpu_custom_call.1} parent=0
    _
  %s13 = ssub.s32 1, %s11
  %s14 = scalar_select 0, %s13, %s11
  $region1: #{tpu_custom_call.1} parent=0
    #allocation2 [shape = 'u8[4096]{0}', space=vmem, size = 0x1000, scoped, tag = 'input window, operand 0, single buffered']
    #allocation3 [shape = 's32[1]{0}', space=sflag, size = 0x4, scoped, tag = 'scoped memory for tpu_custom_call.1']
    #allocation4 [shape = 's32[1]{0}', space=sflag, size = 0x4, scoped, tag = 'scoped memory for tpu_custom_call.1']
    #allocation5 [shape = 'u8[4096]{0}', space=vmem, size = 0x1000, scoped, tag = 'input window, operand 1, single buffered']
    #allocation6 [shape = 's32[1]{0}', space=sflag, size = 0x4, scoped, tag = 'scoped memory for tpu_custom_call.1']
    #allocation7 [shape = 'u8[16384]{0}', space=vmem, size = 0x4000, scoped, tag = 'input window, operand 3, single buffered']
    #allocation8 [shape = 'u8[16384]{0}', space=vmem, size = 0x4000, scoped, tag = 'input window, operand 7, single buffered']
    #allocation9 [shape = 's32[1]{0}', space=sflag, size = 0x4, scoped, tag = 'scoped memory for tpu_custom_call.1']
    #allocation10 [shape = 'u8[4096]{0}', space=vmem, size = 0x1000, scoped, tag = 'output window, operand 0, single buffered']
    %15 = vsyncpa [#allocation3], 0
    %16 = vsyncpa [#allocation6], 0
    %17 = vsyncpa [#allocation9], 0
    %18 = vsyncpa [#allocation4], 0
    // Predicated region
    $region2: #{tpu_custom_call.1} parent=1 // pred_check
      _
    $region3: #{tpu_custom_call.1} parent=1 // pred_check_branch
      %20 = sbr.rel (0) target = $region5
    $region4: #{tpu_custom_call.1} parent=1 // pred_region
      %s22 = ssub.s32 128, 128
      %23 = vsyncadd [#allocation3], %s22
      %s25 = sshll.u32 [#allocation2], 4
      %s26 = int_to_ptr.vmem [resolvable:$true] %s25
      %28 = dma.hbm_to_vmem [thread:$0]  %s0, 128, %s26, [#allocation3]
    $region5: #{tpu_custom_call.1} parent=1 // pred_fallthru
      _
    // Predicated region
    $region6: #{tpu_custom_call.1} parent=1 // pred_check
      _
    $region7: #{tpu_custom_call.1} parent=1 // pred_check_branch
      %30 = sbr.rel (0) target = $region9
    $region8: #{tpu_custom_call.1} parent=1 // pred_region
      %s32 = ssub.s32 128, 128
      %33 = vsyncadd [#allocation6], %s32
      %s35 = sshll.u32 [#allocation5], 4
      %s36 = int_to_ptr.vmem [resolvable:$true] %s35
      %38 = dma.hbm_to_vmem [thread:$0]  %s1, 128, %s36, [#allocation6]
    $region9: #{tpu_custom_call.1} parent=1 // pred_fallthru
      _
    // Predicated region
    $region10: #{tpu_custom_call.1} parent=1 // pred_check
      _
    $region11: #{tpu_custom_call.1} parent=1 // pred_check_branch
      %40 = sbr.rel (0) target = $region13
    $region12: #{tpu_custom_call.1} parent=1 // pred_region
      _
    $region13: #{tpu_custom_call.1} parent=1 // pred_fallthru
      _
    // Predicated region
    $region14: #{tpu_custom_call.1} parent=1 // pred_check
      _
    $region15: #{tpu_custom_call.1} parent=1 // pred_check_branch
      %42 = sbr.rel (0) target = $region17
    $region16: #{tpu_custom_call.1} parent=1 // pred_region
      %s44 = ssub.s32 512, 512
      %45 = vsyncadd [#allocation6], %s44
      %s46 = sshll.u32 [#allocation7], 4
      %s47 = int_to_ptr.vmem [resolvable:$true] %s46
      %52 = dma.hbm_to_vmem [thread:$0]  %s3, 512, %s47, [#allocation6], 128, 128, 8
    $region17: #{tpu_custom_call.1} parent=1 // pred_fallthru
      _
    // Predicated region
    $region18: #{tpu_custom_call.1} parent=1 // pred_check
      _
    $region19: #{tpu_custom_call.1} parent=1 // pred_check_branch
      %54 = sbr.rel (0) target = $region21
    $region20: #{tpu_custom_call.1} parent=1 // pred_region
      _
    $region21: #{tpu_custom_call.1} parent=1 // pred_fallthru
      _
    // Predicated region
    $region22: #{tpu_custom_call.1} parent=1 // pred_check
      _
    $region23: #{tpu_custom_call.1} parent=1 // pred_check_branch
      %56 = sbr.rel (0) target = $region25
    $region24: #{tpu_custom_call.1} parent=1 // pred_region
      _
    $region25: #{tpu_custom_call.1} parent=1 // pred_fallthru
      _
    // Predicated region
    $region26: #{tpu_custom_call.1} parent=1 // pred_check
      _
    $region27: #{tpu_custom_call.1} parent=1 // pred_check_branch
      %58 = sbr.rel (0) target = $region29
    $region28: #{tpu_custom_call.1} parent=1 // pred_region
      _
    $region29: #{tpu_custom_call.1} parent=1 // pred_fallthru
      _
    // Predicated region
    $region30: #{tpu_custom_call.1} parent=1 // pred_check
      _
    $region31: #{tpu_custom_call.1} parent=1 // pred_check_branch
      %60 = sbr.rel (0) target = $region33
    $region32: #{tpu_custom_call.1} parent=1 // pred_region
      %s62 = ssub.s32 512, 512
      %63 = vsyncadd [#allocation9], %s62
      %s64 = sshll.u32 [#allocation8], 4
      %s65 = int_to_ptr.vmem [resolvable:$true] %s64
      %70 = dma.hbm_to_vmem [thread:$0]  %s7, 512, %s65, [#allocation9], 128, 128, 8
    $region33: #{tpu_custom_call.1} parent=1 // pred_fallthru
      _
    // Predicated region
    $region34: #{tpu_custom_call.1} parent=1 // pred_check
      _
    $region35: #{tpu_custom_call.1} parent=1 // pred_check_branch
      %72 = sbr.rel (0) target = $region37
    $region36: #{tpu_custom_call.1} parent=1 // pred_region
      _
    $region37: #{tpu_custom_call.1} parent=1 // pred_fallthru
      _
    // Predicated region
    $region38: #{tpu_custom_call.1} parent=1 // pred_check
      _
    $region39: #{tpu_custom_call.1} parent=1 // pred_check_branch
      %74 = sbr.rel (0) target = $region41
    $region40: #{tpu_custom_call.1} parent=1 // pred_region
      _
    $region41: #{tpu_custom_call.1} parent=1 // pred_fallthru
      _
    // Predicated region
    $region42: #{tpu_custom_call.1} parent=1 // pred_check
      _
    $region43: #{tpu_custom_call.1} parent=1 // pred_check_branch
      %76 = sbr.rel (0) target = $region45
    $region44: #{tpu_custom_call.1} parent=1 // pred_region
      %77 = dma.done [#allocation3], 128
    $region45: #{tpu_custom_call.1} parent=1 // pred_fallthru
      _
    // Predicated region
    $region46: #{tpu_custom_call.1} parent=1 // pred_check
      _
    $region47: #{tpu_custom_call.1} parent=1 // pred_check_branch
      %79 = sbr.rel (0) target = $region49
    $region48: #{tpu_custom_call.1} parent=1 // pred_region
      %80 = dma.done [#allocation6], 128
    $region49: #{tpu_custom_call.1} parent=1 // pred_fallthru
      _
    // Predicated region
    $region50: #{tpu_custom_call.1} parent=1 // pred_check
      _
    $region51: #{tpu_custom_call.1} parent=1 // pred_check_branch
      %82 = sbr.rel (0) target = $region53
    $region52: #{tpu_custom_call.1} parent=1 // pred_region
      %83 = dma.done [#allocation6], 512
    $region53: #{tpu_custom_call.1} parent=1 // pred_fallthru
      _
    // Predicated region
    $region54: #{tpu_custom_call.1} parent=1 // pred_check
      _
    $region55: #{tpu_custom_call.1} parent=1 // pred_check_branch
      %85 = sbr.rel (0) target = $region57
    $region56: #{tpu_custom_call.1} parent=1 // pred_region
      %86 = dma.done [#allocation9], 512
    $region57: #{tpu_custom_call.1} parent=1 // pred_fallthru
      _
    %v87 = vld [vmem:[#allocation2] sm:$0xff]
    %v88 = vld [vmem:[#allocation5] sm:$0xff]
    %v89 = vld [vmem:[%s2] sm:$0x1]
    %v91 = vlaneseq
    %v92 = vshrl.u32 %v91, 7
    %v93 = vsub.s32 0, %v92
    %v94 = vrot.slane %v89, %v93
    %vm96 = vcmask 64512
    %v98 = vsel %vm96, %v87, 0
    %100 = vmatprep.subr.mxu0 0.0
    %101 = vmatpush1.msra.mxu0 %v88
    %102 = vmatprep.subr.mxu0 0.0
    %103 = vmatpush1.msra.mxu0 0.0
    %104 = vmatprep.subr.mxu0 0.0
    %105 = vmatpush1.msra.mxu0 0.0
    %106 = vmatprep.subr.mxu0 0.0
    %107 = vmatpush1.msra.mxu0 0.0
    %108 = vmatprep.subr.mxu0 0.0
    %109 = vmatpush1.msra.mxu0 0.0
    %110 = vmatprep.subr.mxu0 0.0
    %111 = vmatpush1.msra.mxu0 0.0
    %112 = vmatprep.subr.mxu0 0.0
    %113 = vmatpush1.msra.mxu0 0.0
    %114 = vmatprep.subr.mxu0 0.0
    %115 = vmatpush1.msra.mxu0 0.0
    %116 = vmatprep.subr.mxu0 0.0
    %117 = vmatpush1.msra.mxu0 0.0
    %118 = vmatprep.subr.mxu0 0.0
    %119 = vmatpush1.msra.mxu0 0.0
    %120 = vmatprep.subr.mxu0 0.0
    %121 = vmatpush1.msra.mxu0 0.0
    %122 = vmatprep.subr.mxu0 0.0
    %123 = vmatpush1.msra.mxu0 0.0
    %124 = vmatprep.subr.mxu0 0.0
    %125 = vmatpush1.msra.mxu0 0.0
    %126 = vmatprep.subr.mxu0 0.0
    %127 = vmatpush1.msra.mxu0 0.0
    %128 = vmatprep.subr.mxu0 0.0
    %129 = vmatpush1.msra.mxu0 0.0
    %130 = vmatprep.subr.mxu0 0.0
    %131 = vmatpush1.msra.mxu0 0.0
    %132 = vmatprep.subr.mxu0 0.0
    %133 = vmatpush1.msra.mxu0 0.0
    %134 = vmatprep.subr.mxu0 0.0
    %135 = vmatpush1.msra.mxu0 0.0
    %136 = vmatprep.subr.mxu0 0.0
    %137 = vmatpush1.msra.mxu0 0.0
    %138 = vmatprep.subr.mxu0 0.0
    %139 = vmatpush1.msra.mxu0 0.0
    %140 = vmatprep.subr.mxu0 0.0
    %141 = vmatpush1.msra.mxu0 0.0
    %142 = vmatprep.subr.mxu0 0.0
    %143 = vmatpush1.msra.mxu0 0.0
    %144 = vmatprep.subr.mxu0 0.0
    %145 = vmatpush1.msra.mxu0 0.0
    %146 = vmatprep.subr.mxu0 0.0
    %147 = vmatpush1.msra.mxu0 0.0
    %148 = vmatprep.subr.mxu0 0.0
    %149 = vmatpush1.msra.mxu0 0.0
    %150 = vmatprep.subr.mxu0 0.0
    %151 = vmatpush1.msra.mxu0 0.0
    %152 = vmatprep.subr.mxu0 0.0
    %153 = vmatpush1.msra.mxu0 0.0
    %154 = vmatprep.subr.mxu0 0.0
    %155 = vmatpush1.msra.mxu0 0.0
    %156 = vmatprep.subr.mxu0 0.0
    %157 = vmatpush1.msra.mxu0 0.0
    %158 = vmatprep.subr.mxu0 0.0
    %159 = vmatpush1.msra.mxu0 0.0
    %160 = vmatprep.subr.mxu0 0.0
    %161 = vmatpush1.msra.mxu0 0.0
    %162 = vmatprep.subr.mxu0 0.0
    %163 = vmatpush1.msra.mxu0 0.0
    %164 = vmatprep.mubr.f32.mxu0 0.0
    %165 = vmatmul.mubr.f32.gmra.mrb[0].mxu0 %v98
    %v166 = vpop.f32.mrb[0].mxu0
    %v167 = vadd.f32 %v94, %v166
    %v168 = vpop.f32.mrb[0].mxu0
    %169 = vdwg.mxu0
    %v170 = vtanh.pop %v167
    %v171 = vld [vmem:[#allocation7] sm:$0xff]
    %v172 = vld [vmem:[#allocation7 + $0x8] sm:$0xff]
    %v173 = vld [vmem:[#allocation7 + $0x10] sm:$0xff]
    %v174 = vld [vmem:[#allocation7 + $0x18] sm:$0xff]
    %v175 = vld [vmem:[%s4] sm:$0x1]
    %v177 = vlaneseq
    %v178 = vshrl.u32 %v177, 7
    %v179 = vsub.s32 0, %v178
    %v180 = vrot.slane %v175, %v179
    %vm182 = vcmask 261120
    %v184 = vsel %vm182, %v170, 0
    %186 = vmatprep.subr.mxu0 0.0
    %187 = vmatpush1.msra.mxu0 %v171
    %188 = vmatprep.subr.mxu0 0.0
    %189 = vmatpush1.msra.mxu0 %v172
    %190 = vmatprep.subr.mxu0 0.0
    %191 = vmatpush1.msra.mxu0 %v173
    %192 = vmatprep.subr.mxu0 0.0
    %193 = vmatpush1.msra.mxu0 %v174
    %194 = vmatprep.subr.mxu0 0.0
    %195 = vmatpush1.msra.mxu0 0.0
    %196 = vmatprep.subr.mxu0 0.0
    %197 = vmatpush1.msra.mxu0 0.0
    %198 = vmatprep.subr.mxu0 0.0
    %199 = vmatpush1.msra.mxu0 0.0
    %200 = vmatprep.subr.mxu0 0.0
    %201 = vmatpush1.msra.mxu0 0.0
    %202 = vmatprep.subr.mxu0 0.0
    %203 = vmatpush1.msra.mxu0 0.0
    %204 = vmatprep.subr.mxu0 0.0
    %205 = vmatpush1.msra.mxu0 0.0
    %206 = vmatprep.subr.mxu0 0.0
    %207 = vmatpush1.msra.mxu0 0.0
    %208 = vmatprep.subr.mxu0 0.0
    %209 = vmatpush1.msra.mxu0 0.0
    %210 = vmatprep.subr.mxu0 0.0
    %211 = vmatpush1.msra.mxu0 0.0
    %212 = vmatprep.subr.mxu0 0.0
    %213 = vmatpush1.msra.mxu0 0.0
    %214 = vmatprep.subr.mxu0 0.0
    %215 = vmatpush1.msra.mxu0 0.0
    %216 = vmatprep.subr.mxu0 0.0
    %217 = vmatpush1.msra.mxu0 0.0
    %218 = vmatprep.subr.mxu0 0.0
    %219 = vmatpush1.msra.mxu0 0.0
    %220 = vmatprep.subr.mxu0 0.0
    %221 = vmatpush1.msra.mxu0 0.0
    %222 = vmatprep.subr.mxu0 0.0
    %223 = vmatpush1.msra.mxu0 0.0
    %224 = vmatprep.subr.mxu0 0.0
    %225 = vmatpush1.msra.mxu0 0.0
    %226 = vmatprep.subr.mxu0 0.0
    %227 = vmatpush1.msra.mxu0 0.0
    %228 = vmatprep.subr.mxu0 0.0
    %229 = vmatpush1.msra.mxu0 0.0
    %230 = vmatprep.subr.mxu0 0.0
    %231 = vmatpush1.msra.mxu0 0.0
    %232 = vmatprep.subr.mxu0 0.0
    %233 = vmatpush1.msra.mxu0 0.0
    %234 = vmatprep.subr.mxu0 0.0
    %235 = vmatpush1.msra.mxu0 0.0
    %236 = vmatprep.subr.mxu0 0.0
    %237 = vmatpush1.msra.mxu0 0.0
    %238 = vmatprep.subr.mxu0 0.0
    %239 = vmatpush1.msra.mxu0 0.0
    %240 = vmatprep.subr.mxu0 0.0
    %241 = vmatpush1.msra.mxu0 0.0
    %242 = vmatprep.subr.mxu0 0.0
    %243 = vmatpush1.msra.mxu0 0.0
    %244 = vmatprep.subr.mxu0 0.0
    %245 = vmatpush1.msra.mxu0 0.0
    %246 = vmatprep.subr.mxu0 0.0
    %247 = vmatpush1.msra.mxu0 0.0
    %248 = vmatprep.subr.mxu0 0.0
    %249 = vmatpush1.msra.mxu0 0.0
    %250 = vmatprep.mubr.f32.mxu0 0.0
    %251 = vmatmul.mubr.f32.gmra.mrb[0].mxu0 %v184
    %v252 = vpop.f32.mrb[0].mxu0
    %v253 = vadd.f32 %v180, %v252
    %v254 = vpop.f32.mrb[0].mxu0
    %255 = vdwg.mxu0
    %v256 = vtanh.pop %v253
    %v257 = vld [vmem:[%s5] sm:$0x1]
    %258 = vset.pattern.permute.xlu0 8
    %259 = vperm.xlu0 %258, %v87
    %v260 = vpop.permute.xlu0 %259
    %v263 = vlaneseq
    %v264 = vshrl.u32 %v263, 7
    %v265 = vsub.s32 0, %v264
    %v266 = vrot.slane %v257, %v265
    %v268 = vmul.f32 %v260, %v266
    %v269 = vld [vmem:[%s6] sm:$0x1]
    %v271 = vlaneseq
    %v272 = vshrl.u32 %v271, 7
    %v273 = vsub.s32 0, %v272
    %v274 = vrot.slane %v269, %v273
    %v276 = vadd.f32 %v268, %v274
    %v277 = vtanh.pop %v276
    %v278 = vld [vmem:[#allocation8] sm:$0xff]
    %v279 = vld [vmem:[#allocation8 + $0x8] sm:$0xff]
    %v280 = vld [vmem:[#allocation8 + $0x10] sm:$0xff]
    %v281 = vld [vmem:[#allocation8 + $0x18] sm:$0xff]
    %v282 = vld [vmem:[%s8] sm:$0x1]
    %v284 = vlaneseq
    %v285 = vshrl.u32 %v284, 7
    %v286 = vsub.s32 0, %v285
    %v287 = vrot.slane %v282, %v286
    %v290 = vsel %vm182, %v277, 0
    %292 = vmatprep.subr.mxu0 0.0
    %293 = vmatpush1.msra.mxu0 %v278
    %294 = vmatprep.subr.mxu0 0.0
    %295 = vmatpush1.msra.mxu0 %v279
    %296 = vmatprep.subr.mxu0 0.0
    %297 = vmatpush1.msra.mxu0 %v280
    %298 = vmatprep.subr.mxu0 0.0
    %299 = vmatpush1.msra.mxu0 %v281
    %300 = vmatprep.subr.mxu0 0.0
    %301 = vmatpush1.msra.mxu0 0.0
    %302 = vmatprep.subr.mxu0 0.0
    %303 = vmatpush1.msra.mxu0 0.0
    %304 = vmatprep.subr.mxu0 0.0
    %305 = vmatpush1.msra.mxu0 0.0
    %306 = vmatprep.subr.mxu0 0.0
    %307 = vmatpush1.msra.mxu0 0.0
    %308 = vmatprep.subr.mxu0 0.0
    %309 = vmatpush1.msra.mxu0 0.0
    %310 = vmatprep.subr.mxu0 0.0
    %311 = vmatpush1.msra.mxu0 0.0
    %312 = vmatprep.subr.mxu0 0.0
    %313 = vmatpush1.msra.mxu0 0.0
    %314 = vmatprep.subr.mxu0 0.0
    %315 = vmatpush1.msra.mxu0 0.0
    %316 = vmatprep.subr.mxu0 0.0
    %317 = vmatpush1.msra.mxu0 0.0
    %318 = vmatprep.subr.mxu0 0.0
    %319 = vmatpush1.msra.mxu0 0.0
    %320 = vmatprep.subr.mxu0 0.0
    %321 = vmatpush1.msra.mxu0 0.0
    %322 = vmatprep.subr.mxu0 0.0
    %323 = vmatpush1.msra.mxu0 0.0
    %324 = vmatprep.subr.mxu0 0.0
    %325 = vmatpush1.msra.mxu0 0.0
    %326 = vmatprep.subr.mxu0 0.0
    %327 = vmatpush1.msra.mxu0 0.0
    %328 = vmatprep.subr.mxu0 0.0
    %329 = vmatpush1.msra.mxu0 0.0
    %330 = vmatprep.subr.mxu0 0.0
    %331 = vmatpush1.msra.mxu0 0.0
    %332 = vmatprep.subr.mxu0 0.0
    %333 = vmatpush1.msra.mxu0 0.0
    %334 = vmatprep.subr.mxu0 0.0
    %335 = vmatpush1.msra.mxu0 0.0
    %336 = vmatprep.subr.mxu0 0.0
    %337 = vmatpush1.msra.mxu0 0.0
    %338 = vmatprep.subr.mxu0 0.0
    %339 = vmatpush1.msra.mxu0 0.0
    %340 = vmatprep.subr.mxu0 0.0
    %341 = vmatpush1.msra.mxu0 0.0
    %342 = vmatprep.subr.mxu0 0.0
    %343 = vmatpush1.msra.mxu0 0.0
    %344 = vmatprep.subr.mxu0 0.0
    %345 = vmatpush1.msra.mxu0 0.0
    %346 = vmatprep.subr.mxu0 0.0
    %347 = vmatpush1.msra.mxu0 0.0
    %348 = vmatprep.subr.mxu0 0.0
    %349 = vmatpush1.msra.mxu0 0.0
    %350 = vmatprep.subr.mxu0 0.0
    %351 = vmatpush1.msra.mxu0 0.0
    %352 = vmatprep.subr.mxu0 0.0
    %353 = vmatpush1.msra.mxu0 0.0
    %354 = vmatprep.subr.mxu0 0.0
    %355 = vmatpush1.msra.mxu0 0.0
    %356 = vmatprep.mubr.f32.mxu0 0.0
    %357 = vmatmul.mubr.f32.gmra.mrb[0].mxu0 %v290
    %v358 = vpop.f32.mrb[0].mxu0
    %v359 = vadd.f32 %v287, %v358
    %v360 = vpop.f32.mrb[0].mxu0
    %361 = vdwg.mxu0
    %v362 = vtanh.pop %v359
    %v363 = vld [vmem:[%s9] sm:$0xff]
    %v364 = vmul.f32 %v256, %v362
    %v366 = vsel %vm182, %v363, 0
    %v369 = vsel %vm182, %v364, 0
    %371 = vmatprep.subr.mxu0 0.0
    %372 = vmatpush1.xpose.msra.mxu0 %v369
    %373 = vmatprep.subr.mxu0 0.0
    %374 = vmatpush1.xpose.msra.mxu0 0.0
    %375 = vmatprep.subr.mxu0 0.0
    %376 = vmatpush1.xpose.msra.mxu0 0.0
    %377 = vmatprep.subr.mxu0 0.0
    %378 = vmatpush1.xpose.msra.mxu0 0.0
    %379 = vmatprep.subr.mxu0 0.0
    %380 = vmatpush1.xpose.msra.mxu0 0.0
    %381 = vmatprep.subr.mxu0 0.0
    %382 = vmatpush1.xpose.msra.mxu0 0.0
    %383 = vmatprep.subr.mxu0 0.0
    %384 = vmatpush1.xpose.msra.mxu0 0.0
    %385 = vmatprep.subr.mxu0 0.0
    %386 = vmatpush1.xpose.msra.mxu0 0.0
    %387 = vmatprep.subr.mxu0 0.0
    %388 = vmatpush1.xpose.msra.mxu0 0.0
    %389 = vmatprep.subr.mxu0 0.0
    %390 = vmatpush1.xpose.msra.mxu0 0.0
    %391 = vmatprep.subr.mxu0 0.0
    %392 = vmatpush1.xpose.msra.mxu0 0.0
    %393 = vmatprep.subr.mxu0 0.0
    %394 = vmatpush1.xpose.msra.mxu0 0.0
    %395 = vmatprep.subr.mxu0 0.0
    %396 = vmatpush1.xpose.msra.mxu0 0.0
    %397 = vmatprep.subr.mxu0 0.0
    %398 = vmatpush1.xpose.msra.mxu0 0.0
    %399 = vmatprep.subr.mxu0 0.0
    %400 = vmatpush1.xpose.msra.mxu0 0.0
    %401 = vmatprep.subr.mxu0 0.0
    %402 = vmatpush1.xpose.msra.mxu0 0.0
    %403 = vmatprep.subr.mxu0 0.0
    %404 = vmatpush1.xpose.msra.mxu0 0.0
    %405 = vmatprep.subr.mxu0 0.0
    %406 = vmatpush1.xpose.msra.mxu0 0.0
    %407 = vmatprep.subr.mxu0 0.0
    %408 = vmatpush1.xpose.msra.mxu0 0.0
    %409 = vmatprep.subr.mxu0 0.0
    %410 = vmatpush1.xpose.msra.mxu0 0.0
    %411 = vmatprep.subr.mxu0 0.0
    %412 = vmatpush1.xpose.msra.mxu0 0.0
    %413 = vmatprep.subr.mxu0 0.0
    %414 = vmatpush1.xpose.msra.mxu0 0.0
    %415 = vmatprep.subr.mxu0 0.0
    %416 = vmatpush1.xpose.msra.mxu0 0.0
    %417 = vmatprep.subr.mxu0 0.0
    %418 = vmatpush1.xpose.msra.mxu0 0.0
    %419 = vmatprep.subr.mxu0 0.0
    %420 = vmatpush1.xpose.msra.mxu0 0.0
    %421 = vmatprep.subr.mxu0 0.0
    %422 = vmatpush1.xpose.msra.mxu0 0.0
    %423 = vmatprep.subr.mxu0 0.0
    %424 = vmatpush1.xpose.msra.mxu0 0.0
    %425 = vmatprep.subr.mxu0 0.0
    %426 = vmatpush1.xpose.msra.mxu0 0.0
    %427 = vmatprep.subr.mxu0 0.0
    %428 = vmatpush1.xpose.msra.mxu0 0.0
    %429 = vmatprep.subr.mxu0 0.0
    %430 = vmatpush1.xpose.msra.mxu0 0.0
    %431 = vmatprep.subr.mxu0 0.0
    %432 = vmatpush1.xpose.msra.mxu0 0.0
    %433 = vmatprep.subr.mxu0 0.0
    %434 = vmatpush1.xpose.msra.mxu0 0.0
    %435 = vmatprep.mubr.f32.mxu0 0.0
    %436 = vmatmul.mubr.f32.gmra.mrb[0].mxu0 %v366
    %v437 = vpop.f32.mrb[0].mxu0
    %v438 = vadd.f32 0.0, %v437
    %v439 = vpop.f32.mrb[0].mxu0
    %440 = vdwg.mxu0
    %441 = vst.msk [vmem:[#allocation10] sm:$0xff] %vm96, %v438
    // Predicated region
    $region58: #{tpu_custom_call.1} parent=1 // pred_check
      _
    $region59: #{tpu_custom_call.1} parent=1 // pred_check_branch
      %443 = sbr.rel (0) target = $region61
    $region60: #{tpu_custom_call.1} parent=1 // pred_region
      %s445 = ssub.s32 128, 128
      %446 = vsyncadd [#allocation4], %s445
      %s448 = sshll.u32 [#allocation10], 4
      %s449 = int_to_ptr.vmem [resolvable:$true] %s448
      %451 = dma.vmem_to_hbm [thread:$0]  %s449, 128, %s10, [#allocation4]
    $region61: #{tpu_custom_call.1} parent=1 // pred_fallthru
      _
    // Predicated region
    $region62: #{tpu_custom_call.1} parent=1 // pred_check
      _
    $region63: #{tpu_custom_call.1} parent=1 // pred_check_branch
      %453 = sbr.rel (0) target = $region65
    $region64: #{tpu_custom_call.1} parent=1 // pred_region
      %454 = dma.done [#allocation4], 128
    $region65: #{tpu_custom_call.1} parent=1 // pred_fallthru
      _
    %455 = vsyncpa [#allocation3], 1
    %456 = vsyncpa [#allocation6], 1
    %457 = vsyncpa [#allocation9], 1
    %458 = vsyncpa [#allocation4], 1

</llo_original>
